<compile_context>
chip_gen: v7x
topology: tpu7x:2x2x1
jax: 0.10.0
libtpu: 0.0.40
codegen_flags: <defaults>
</compile_context>

<pallas_src>
import jax
import jax.numpy as jnp
from jax.experimental import pallas as pl
from jax.experimental.pallas import tpu as pltpu


def mlp_kernel(x_ref, w1_ref, b1_ref, w2_ref, b2_ref, w3_ref, b3_ref, out_ref):
    # Load f32 x tile, cast to bf16 in-kernel (cheap VPU op, hidden under MXU/DMA).
    x = x_ref[...].astype(jnp.bfloat16)
    # Layer 1: Linear + ReLU (bf16 x bf16 -> f32 accumulate)
    h1 = jnp.dot(x, w1_ref[...], preferred_element_type=jnp.float32)
    h1 = jnp.maximum(h1 + b1_ref[...], 0.0)
    # Layer 2: Linear + ReLU
    h2 = jnp.dot(h1.astype(jnp.bfloat16), w2_ref[...],
                 preferred_element_type=jnp.float32)
    h2 = jnp.maximum(h2 + b2_ref[...], 0.0)
    # Layer 3: Linear -> logits (f32)
    logits = jnp.dot(h2.astype(jnp.bfloat16), w3_ref[...],
                     preferred_element_type=jnp.float32)
    out_ref[...] = (logits + b3_ref[...]).astype(out_ref.dtype)


def _round_up(v, m):
    return ((v + m - 1) // m) * m


def _choose_fold(num_inputs):
    # Fold f batch rows into the lane axis so K = f*num_inputs approaches 128.
    if num_inputs <= 0 or num_inputs > 128:
        return 1
    return max(1, min(8, 128 // num_inputs))


def _choose_tile(rows):
    # rows = folded batch rows. Small batch: one tile (per-step overhead ~0.35us
    # dwarfs the tile DMA, nothing to pipeline). Large batch: ~2K-row tiles but
    # >= 4 grid steps so each v7x TensorCore still has >= 2 steps to pipeline.
    if rows <= 2048:
        return _round_up(max(rows, 8), 8)
    n_steps = max(4, pl.cdiv(rows, 2048))
    return _round_up(pl.cdiv(rows, n_steps), 8)


def _block_diag(w, fold):
    if fold == 1:
        return w
    return jax.scipy.linalg.block_diag(*([w] * fold))


def mlp_forward(x, params):
    w1, b1, w2, b2, w3, b3 = params
    B, num_inputs = x.shape
    num_outputs = w3.shape[1]

    fold = _choose_fold(num_inputs)

    # Fold weights into block-diagonal form (exact), cast weights to bf16 once.
    w1f = _block_diag(w1, fold).astype(jnp.bfloat16)
    w2f = _block_diag(w2, fold).astype(jnp.bfloat16)
    w3f = _block_diag(w3, fold).astype(jnp.bfloat16)
    b1f = jnp.tile(b1.astype(jnp.float32), (1, fold))
    b2f = jnp.tile(b2.astype(jnp.float32), (1, fold))
    b3f = jnp.tile(b3.astype(jnp.float32), (1, fold))

    ni_f = fold * num_inputs
    h1_f = w1f.shape[1]
    h2_f = w2f.shape[1]
    no_f = fold * num_outputs

    # Pad the batch just enough for the fold + tile (padding rows give
    # bias-driven garbage logits that are sliced off below).
    rows = pl.cdiv(B, fold)
    tm = _choose_tile(rows)
    rows_pad = _round_up(rows, tm)
    B_pad = rows_pad * fold
    if B_pad != B:
        x = jnp.pad(x, ((0, B_pad - B), (0, 0)))
    x_folded = x.reshape(rows_pad, ni_f)  # free, row-major

    grid = (rows_pad // tm,)
    full2d = lambda shape: pl.BlockSpec(shape, lambda i: (0, 0))

    out = pl.pallas_call(
        mlp_kernel,
        out_shape=jax.ShapeDtypeStruct((rows_pad, no_f), jnp.float32),
        grid_spec=pltpu.PrefetchScalarGridSpec(
            num_scalar_prefetch=0,
            grid=grid,
            in_specs=[
                pl.BlockSpec((tm, ni_f), lambda i: (i, 0)),  # folded x tile (f32)
                full2d((ni_f, h1_f)),                        # W1' (resident)
                full2d((1, h1_f)),                           # b1'
                full2d((h1_f, h2_f)),                        # W2'
                full2d((1, h2_f)),                           # b2'
                full2d((h2_f, no_f)),                        # W3'
                full2d((1, no_f)),                           # b3'
            ],
            out_specs=pl.BlockSpec((tm, no_f), lambda i: (i, 0)),
        ),
        compiler_params=pltpu.CompilerParams(
            dimension_semantics=("parallel",),
            vmem_limit_bytes=32 * 1024 * 1024,
        ),
    )(x_folded, w1f, b1f, w2f, b2f, w3f, b3f)

    # Unfold (free, row-major) and drop padding rows.
    return out.reshape(B_pad, num_outputs)[:B]


def init_params(key, num_inputs, num_outputs, dtype=jnp.float32):
    """Deterministic init mimicking nn.Linear's U(-1/sqrt(fan_in), 1/sqrt(fan_in))."""
    dims = [(num_inputs, 30), (30, 20), (20, num_outputs)]
    params = []
    for (fan_in, fan_out) in dims:
        key, kw, kb = jax.random.split(key, 3)
        bound = 1.0 / jnp.sqrt(jnp.float32(fan_in))
        w = jax.random.uniform(kw, (fan_in, fan_out), dtype, -bound, bound)
        b = jax.random.uniform(kb, (1, fan_out), dtype, -bound, bound)
        params += [w, b]
    return tuple(params)


if __name__ == "__main__":
    # Ragged batch (500) exercises the fold-pad path (pads to 512 rows = 128 folded).
    num_inputs, num_outputs, batch = 32, 4, 500

    key = jax.random.PRNGKey(0)
    key, kx = jax.random.split(key)
    x = jax.random.normal(kx, (batch, num_inputs), dtype=jnp.float32)
    params = init_params(key, num_inputs, num_outputs)

    out = jax.block_until_ready(mlp_forward(x, params))

    # Pure-JAX reference with identical bf16-input / f32-accumulate numerics.
    w1, b1, w2, b2, w3, b3 = params
    bf = jnp.bfloat16
    r = jnp.maximum(
        jnp.dot(x.astype(bf), w1.astype(bf), preferred_element_type=jnp.float32) + b1,
        0.0)
    r = jnp.maximum(
        jnp.dot(r.astype(bf), w2.astype(bf), preferred_element_type=jnp.float32) + b2,
        0.0)
    ref = jnp.dot(r.astype(bf), w3.astype(bf), preferred_element_type=jnp.float32) + b3

    assert out.shape == (batch, num_outputs)
    assert out.dtype == jnp.float32
    assert jnp.allclose(out, ref, atol=1e-2, rtol=1e-2)

    print("KERNEL_OK")
</pallas_src>

<mosaic_0001>
module attributes {stable_mosaic.version = 11 : i64} {
  func.func @mlp_kernel(%arg0: i32, %arg1: memref<128x128xf32, #tpu.memory_space<vmem>>, %arg2: memref<128x120xbf16, #tpu.memory_space<vmem>>, %arg3: memref<1x120xf32, #tpu.memory_space<vmem>>, %arg4: memref<120x80xbf16, #tpu.memory_space<vmem>>, %arg5: memref<1x80xf32, #tpu.memory_space<vmem>>, %arg6: memref<80x16xbf16, #tpu.memory_space<vmem>>, %arg7: memref<1x16xf32, #tpu.memory_space<vmem>>, %arg8: memref<128x16xf32, #tpu.memory_space<vmem>>) attributes {dimension_semantics = [#tpu.dimension_semantics<parallel>], iteration_bounds = array<i64: 1>, scalar_prefetch = 0 : i64, scratch_operands = 0 : i64, tpu.core_type = #tpu.core_type<tc>, window_params = [{transform_indices = @transform_0, window_bounds = array<i64: 128, 128>}, {pipeline_mode = #tpu.pipeline_mode<synchronous>, transform_indices = @transform_1, window_bounds = array<i64: 128, 120>}, {pipeline_mode = #tpu.pipeline_mode<synchronous>, transform_indices = @transform_2, window_bounds = array<i64: 1, 120>}, {pipeline_mode = #tpu.pipeline_mode<synchronous>, transform_indices = @transform_3, window_bounds = array<i64: 120, 80>}, {pipeline_mode = #tpu.pipeline_mode<synchronous>, transform_indices = @transform_4, window_bounds = array<i64: 1, 80>}, {pipeline_mode = #tpu.pipeline_mode<synchronous>, transform_indices = @transform_5, window_bounds = array<i64: 80, 16>}, {pipeline_mode = #tpu.pipeline_mode<synchronous>, transform_indices = @transform_6, window_bounds = array<i64: 1, 16>}, {transform_indices = @transform_7, window_bounds = array<i64: 128, 16>}]} {
    %c0 = arith.constant 0 : index
    %c0_0 = arith.constant 0 : index
    %0 = vector.load %arg1[%c0, %c0_0] : memref<128x128xf32, #tpu.memory_space<vmem>>, vector<128x128xf32>
    %1 = arith.truncf %0 : vector<128x128xf32> to vector<128x128xbf16>
    %c0_1 = arith.constant 0 : index
    %c0_2 = arith.constant 0 : index
    %2 = vector.load %arg2[%c0_1, %c0_2] : memref<128x120xbf16, #tpu.memory_space<vmem>>, vector<128x120xbf16>
    %cst = arith.constant dense<0.000000e+00> : vector<128x120xf32>
    %3 = tpu.matmul %1, %2, %cst {dimension_numbers = #tpu.dot_dimension_numbers<[1], [0], [0], [1], [0, 0, 1, 1], [], []>} : vector<128x128xbf16>, vector<128x120xbf16>, vector<128x120xf32> -> vector<128x120xf32>
    %c0_3 = arith.constant 0 : index
    %c0_4 = arith.constant 0 : index
    %4 = vector.load %arg3[%c0_3, %c0_4] : memref<1x120xf32, #tpu.memory_space<vmem>>, vector<1x120xf32>
    %5 = vector.broadcast %4 : vector<1x120xf32> to vector<128x120xf32>
    %6 = arith.addf %3, %5 : vector<128x120xf32>
    %cst_5 = arith.constant 0.000000e+00 : f32
    %7 = vector.broadcast %cst_5 : f32 to vector<128x120xf32>
    %8 = arith.maximumf %6, %7 : vector<128x120xf32>
    %9 = arith.truncf %8 : vector<128x120xf32> to vector<128x120xbf16>
    %c0_6 = arith.constant 0 : index
    %c0_7 = arith.constant 0 : index
    %10 = vector.load %arg4[%c0_6, %c0_7] : memref<120x80xbf16, #tpu.memory_space<vmem>>, vector<120x80xbf16>
    %cst_8 = arith.constant dense<0.000000e+00> : vector<128x80xf32>
    %11 = tpu.matmul %9, %10, %cst_8 {dimension_numbers = #tpu.dot_dimension_numbers<[1], [0], [0], [1], [0, 0, 1, 1], [], []>} : vector<128x120xbf16>, vector<120x80xbf16>, vector<128x80xf32> -> vector<128x80xf32>
    %c0_9 = arith.constant 0 : index
    %c0_10 = arith.constant 0 : index
    %12 = vector.load %arg5[%c0_9, %c0_10] : memref<1x80xf32, #tpu.memory_space<vmem>>, vector<1x80xf32>
    %13 = vector.broadcast %12 : vector<1x80xf32> to vector<128x80xf32>
    %14 = arith.addf %11, %13 : vector<128x80xf32>
    %cst_11 = arith.constant 0.000000e+00 : f32
    %15 = vector.broadcast %cst_11 : f32 to vector<128x80xf32>
    %16 = arith.maximumf %14, %15 : vector<128x80xf32>
    %17 = arith.truncf %16 : vector<128x80xf32> to vector<128x80xbf16>
    %c0_12 = arith.constant 0 : index
    %c0_13 = arith.constant 0 : index
    %18 = vector.load %arg6[%c0_12, %c0_13] : memref<80x16xbf16, #tpu.memory_space<vmem>>, vector<80x16xbf16>
    %cst_14 = arith.constant dense<0.000000e+00> : vector<128x16xf32>
    %19 = tpu.matmul %17, %18, %cst_14 {dimension_numbers = #tpu.dot_dimension_numbers<[1], [0], [0], [1], [0, 0, 1, 1], [], []>} : vector<128x80xbf16>, vector<80x16xbf16>, vector<128x16xf32> -> vector<128x16xf32>
    %c0_15 = arith.constant 0 : index
    %c0_16 = arith.constant 0 : index
    %20 = vector.load %arg7[%c0_15, %c0_16] : memref<1x16xf32, #tpu.memory_space<vmem>>, vector<1x16xf32>
    %21 = vector.broadcast %20 : vector<1x16xf32> to vector<128x16xf32>
    %22 = arith.addf %19, %21 : vector<128x16xf32>
    %c0_17 = arith.constant 0 : index
    %c0_18 = arith.constant 0 : index
    %23 = vector.load %arg8[%c0_17, %c0_18] : memref<128x16xf32, #tpu.memory_space<vmem>>, vector<128x16xf32>
    tpu.vector_store %arg8[%c0_17, %c0_18], %22 {strides = array<i32>} : memref<128x16xf32, #tpu.memory_space<vmem>>, vector<128x16xf32>,
    return
  }
  func.func @transform_0(%arg0: i32) -> (i32, i32) {
    %c0_i32 = arith.constant 0 : i32
    %c0_i32_0 = arith.constant 0 : i32
    return %arg0, %c0_i32 : i32, i32
  }
  func.func @transform_1(%arg0: i32) -> (i32, i32) {
    %c0_i32 = arith.constant 0 : i32
    %c0_i32_0 = arith.constant 0 : i32
    %c0_i32_1 = arith.constant 0 : i32
    return %c0_i32, %c0_i32_0 : i32, i32
  }
  func.func @transform_2(%arg0: i32) -> (i32, i32) {
    %c0_i32 = arith.constant 0 : i32
    %c0_i32_0 = arith.constant 0 : i32
    %c0_i32_1 = arith.constant 0 : i32
    return %c0_i32, %c0_i32_0 : i32, i32
  }
  func.func @transform_3(%arg0: i32) -> (i32, i32) {
    %c0_i32 = arith.constant 0 : i32
    %c0_i32_0 = arith.constant 0 : i32
    %c0_i32_1 = arith.constant 0 : i32
    return %c0_i32, %c0_i32_0 : i32, i32
  }
  func.func @transform_4(%arg0: i32) -> (i32, i32) {
    %c0_i32 = arith.constant 0 : i32
    %c0_i32_0 = arith.constant 0 : i32
    %c0_i32_1 = arith.constant 0 : i32
    return %c0_i32, %c0_i32_0 : i32, i32
  }
  func.func @transform_5(%arg0: i32) -> (i32, i32) {
    %c0_i32 = arith.constant 0 : i32
    %c0_i32_0 = arith.constant 0 : i32
    %c0_i32_1 = arith.constant 0 : i32
    return %c0_i32, %c0_i32_0 : i32, i32
  }
  func.func @transform_6(%arg0: i32) -> (i32, i32) {
    %c0_i32 = arith.constant 0 : i32
    %c0_i32_0 = arith.constant 0 : i32
    %c0_i32_1 = arith.constant 0 : i32
    return %c0_i32, %c0_i32_0 : i32, i32
  }
  func.func @transform_7(%arg0: i32) -> (i32, i32) {
    %c0_i32 = arith.constant 0 : i32
    %c0_i32_0 = arith.constant 0 : i32
    return %arg0, %c0_i32 : i32, i32
  }
}

</mosaic_0001>

<llo_original>
// kernel: tpu_custom_call.1
$region0: #{tpu_custom_call.1}
  #allocation0 [shape = 'u32[]', space=smem, size = 0x4, offset = 0x4, fixed_abs, tag = 'smem constant byte address 0x4 - core index']
  #allocation1 [shape = 'u32[144,128]{1,0:T(1,128)}', space=vmem, size = 0x12000, scoped, tag = 'internal scratch']
  %s0 = inlined_call_operand.vmem [shape: f32[128,128], index: 0, kind: input, shape index: {}]
  %s1 = inlined_call_operand.vmem [shape: bf16[128,120], index: 1, kind: input, shape index: {}]
  %s2 = inlined_call_operand.vmem [shape: f32[1,120], index: 2, kind: input, shape index: {}]
  %s3 = inlined_call_operand.vmem [shape: bf16[120,80], index: 3, kind: input, shape index: {}]
  %s4 = inlined_call_operand.vmem [shape: f32[1,80], index: 4, kind: input, shape index: {}]
  %s5 = inlined_call_operand.vmem [shape: bf16[80,16], index: 5, kind: input, shape index: {}]
  %s6 = inlined_call_operand.vmem [shape: f32[1,16], index: 6, kind: input, shape index: {}]
  %s7 = inlined_call_operand.vmem [shape: f32[128,16], index: 7, kind: output, shape index: {}]
  %s8 = sld [smem:[#allocation0]]
  $region38: #{tpu_custom_call.1} parent=0
    _
  %s10 = ssub.s32 1, %s8
  %s11 = scalar_select 0, %s10, %s8
  // Predicated region
  $region2: #{tpu_custom_call.1} parent=0 // pred_check
    _
  $region3: #{tpu_custom_call.1} parent=0 // pred_check_branch
    %13 = sbr.rel (0) target = $region5
  $region4: #{tpu_custom_call.1} parent=0 // pred_region
    _
  $region5: #{tpu_custom_call.1} parent=0 // pred_fallthru
    _
  // Predicated region
  $region6: #{tpu_custom_call.1} parent=0 // pred_check
    _
  $region7: #{tpu_custom_call.1} parent=0 // pred_check_branch
    %15 = sbr.rel (0) target = $region9
  $region8: #{tpu_custom_call.1} parent=0 // pred_region
    _
  $region9: #{tpu_custom_call.1} parent=0 // pred_fallthru
    _
  // Predicated region
  $region10: #{tpu_custom_call.1} parent=0 // pred_check
    _
  $region11: #{tpu_custom_call.1} parent=0 // pred_check_branch
    %17 = sbr.rel (0) target = $region13
  $region12: #{tpu_custom_call.1} parent=0 // pred_region
    _
  $region13: #{tpu_custom_call.1} parent=0 // pred_fallthru
    _
  // Predicated region
  $region14: #{tpu_custom_call.1} parent=0 // pred_check
    _
  $region15: #{tpu_custom_call.1} parent=0 // pred_check_branch
    %19 = sbr.rel (0) target = $region17
  $region16: #{tpu_custom_call.1} parent=0 // pred_region
    _
  $region17: #{tpu_custom_call.1} parent=0 // pred_fallthru
    _
  // Predicated region
  $region18: #{tpu_custom_call.1} parent=0 // pred_check
    _
  $region19: #{tpu_custom_call.1} parent=0 // pred_check_branch
    %21 = sbr.rel (0) target = $region21
  $region20: #{tpu_custom_call.1} parent=0 // pred_region
    _
  $region21: #{tpu_custom_call.1} parent=0 // pred_fallthru
    _
  // Predicated region
  $region22: #{tpu_custom_call.1} parent=0 // pred_check
    _
  $region23: #{tpu_custom_call.1} parent=0 // pred_check_branch
    %23 = sbr.rel (0) target = $region25
  $region24: #{tpu_custom_call.1} parent=0 // pred_region
    _
  $region25: #{tpu_custom_call.1} parent=0 // pred_fallthru
    _
  // Predicated region
  $region26: #{tpu_custom_call.1} parent=0 // pred_check
    _
  $region27: #{tpu_custom_call.1} parent=0 // pred_check_branch
    %25 = sbr.rel (0) target = $region29
  $region28: #{tpu_custom_call.1} parent=0 // pred_region
    _
  $region29: #{tpu_custom_call.1} parent=0 // pred_fallthru
    _
  %v27 = vld [vmem:[%s0] sm:$0xff]
  %v28 = vld [vmem:[%s0 + $0x8] sm:$0xff]
  %v29 = vld [vmem:[%s0 + $0x10] sm:$0xff]
  %v30 = vld [vmem:[%s0 + $0x18] sm:$0xff]
  %v31 = vld [vmem:[%s0 + $0x20] sm:$0xff]
  %v32 = vld [vmem:[%s0 + $0x28] sm:$0xff]
  %v33 = vld [vmem:[%s0 + $0x30] sm:$0xff]
  %v34 = vld [vmem:[%s0 + $0x38] sm:$0xff]
  %v35 = vld [vmem:[%s0 + $0x40] sm:$0xff]
  %v36 = vld [vmem:[%s0 + $0x48] sm:$0xff]
  %v37 = vld [vmem:[%s0 + $0x50] sm:$0xff]
  %v38 = vld [vmem:[%s0 + $0x58] sm:$0xff]
  %v39 = vld [vmem:[%s0 + $0x60] sm:$0xff]
  %v40 = vld [vmem:[%s0 + $0x68] sm:$0xff]
  %v41 = vld [vmem:[%s0 + $0x70] sm:$0xff]
  %v42 = vld [vmem:[%s0 + $0x78] sm:$0xff]
  %v43 = vpack.c.bf16 %v28, %v27
  %v44 = vpack.c.bf16 %v30, %v29
  %v45 = vpack.c.bf16 %v32, %v31
  %v46 = vpack.c.bf16 %v34, %v33
  %v47 = vpack.c.bf16 %v36, %v35
  %v48 = vpack.c.bf16 %v38, %v37
  %v49 = vpack.c.bf16 %v40, %v39
  %v50 = vpack.c.bf16 %v42, %v41
  %v51 = vld [vmem:[%s1] sm:$0xf]
  %v52 = vld [vmem:[%s1 + $0x4] sm:$0xf]
  %v53 = vld [vmem:[%s1 + $0x8] sm:$0xf]
  %v54 = vld [vmem:[%s1 + $0xc] sm:$0xf]
  %v55 = vld [vmem:[%s1 + $0x10] sm:$0xf]
  %v56 = vld [vmem:[%s1 + $0x14] sm:$0xf]
  %v57 = vld [vmem:[%s1 + $0x18] sm:$0xf]
  %v58 = vld [vmem:[%s1 + $0x1c] sm:$0xf]
  %v59 = vld [vmem:[%s1 + $0x20] sm:$0xf]
  %v60 = vld [vmem:[%s1 + $0x24] sm:$0xf]
  %v61 = vld [vmem:[%s1 + $0x28] sm:$0xf]
  %v62 = vld [vmem:[%s1 + $0x2c] sm:$0xf]
  %v63 = vld [vmem:[%s1 + $0x30] sm:$0xf]
  %v64 = vld [vmem:[%s1 + $0x34] sm:$0xf]
  %v65 = vld [vmem:[%s1 + $0x38] sm:$0xf]
  %v66 = vld [vmem:[%s1 + $0x3c] sm:$0xf]
  %v67 = vld [vmem:[%s2] sm:$0x1]
  %v69 = vlaneseq
  %v70 = vshrl.u32 %v69, 7
  %v71 = vsub.s32 0, %v70
  %v72 = vrot.slane %v67, %v71
  %v90 = vunpack.c.l.b16 %v51
  %v91 = vunpack.c.l.b16 %v52
  %v92 = vunpack.c.l.b16 %v53
  %v93 = vunpack.c.l.b16 %v54
  %v94 = vunpack.c.l.b16 %v55
  %v95 = vunpack.c.l.b16 %v56
  %v96 = vunpack.c.l.b16 %v57
  %v97 = vunpack.c.l.b16 %v58
  %v98 = vunpack.c.l.b16 %v59
  %v99 = vunpack.c.l.b16 %v60
  %v100 = vunpack.c.l.b16 %v61
  %v101 = vunpack.c.l.b16 %v62
  %v102 = vunpack.c.l.b16 %v63
  %v103 = vunpack.c.l.b16 %v64
  %v104 = vunpack.c.l.b16 %v65
  %v105 = vunpack.c.l.b16 %v66
  %v106 = vpack.c.b16 %v91, %v90
  %v107 = vpack.c.b16 %v93, %v92
  %v108 = vpack.c.b16 %v95, %v94
  %v109 = vpack.c.b16 %v97, %v96
  %v110 = vpack.c.b16 %v99, %v98
  %v111 = vpack.c.b16 %v101, %v100
  %v112 = vpack.c.b16 %v103, %v102
  %v113 = vpack.c.b16 %v105, %v104
  %122 = vmatprep.subr.bf16.mxu0 0
  %123 = vmatpush1.bf16.msra.mxu0 %v106
  %124 = vmatprep.subr.bf16.mxu0 0
  %125 = vmatpush1.bf16.msra.mxu0 %v107
  %126 = vmatprep.subr.bf16.mxu0 0
  %127 = vmatpush1.bf16.msra.mxu0 %v108
  %128 = vmatprep.subr.bf16.mxu0 0
  %129 = vmatpush1.bf16.msra.mxu0 %v109
  %130 = vmatprep.subr.bf16.mxu0 0
  %131 = vmatpush1.bf16.msra.mxu0 %v110
  %132 = vmatprep.subr.bf16.mxu0 0
  %133 = vmatpush1.bf16.msra.mxu0 %v111
  %134 = vmatprep.subr.bf16.mxu0 0
  %135 = vmatpush1.bf16.msra.mxu0 %v112
  %136 = vmatprep.subr.bf16.mxu0 0
  %137 = vmatpush1.bf16.msra.mxu0 %v113
  %138 = vmatprep.subr.bf16.mxu0 0
  %139 = vmatpush1.bf16.msra.mxu0 0
  %140 = vmatprep.subr.bf16.mxu0 0
  %141 = vmatpush1.bf16.msra.mxu0 0
  %142 = vmatprep.subr.bf16.mxu0 0
  %143 = vmatpush1.bf16.msra.mxu0 0
  %144 = vmatprep.subr.bf16.mxu0 0
  %145 = vmatpush1.bf16.msra.mxu0 0
  %146 = vmatprep.subr.bf16.mxu0 0
  %147 = vmatpush1.bf16.msra.mxu0 0
  %148 = vmatprep.subr.bf16.mxu0 0
  %149 = vmatpush1.bf16.msra.mxu0 0
  %150 = vmatprep.subr.bf16.mxu0 0
  %151 = vmatpush1.bf16.msra.mxu0 0
  %152 = vmatprep.subr.bf16.mxu0 0
  %153 = vmatpush1.bf16.msra.mxu0 0
  %154 = vmatprep.mubr.bf16.mxu0 0
  %155 = vmatmul.mubr.bf16.gmra.mrb[0].mxu0 %v43
  %v156 = vpop.f32.mrb[0].mxu0
  %v157 = vadd.f32 %v72, %v156
  %v158 = vpop.f32.mrb[0].mxu0
  %v159 = vpop.f32.mrb[0].mxu0
  %v160 = vadd.f32 %v72, %v159
  %v161 = vpop.f32.mrb[0].mxu0
  %162 = vmatprep.mubr.bf16.mxu0 0
  %163 = vmatmul.mubr.bf16.gmra.mrb[0].mxu0 %v44
  %v164 = vpop.f32.mrb[0].mxu0
  %v165 = vadd.f32 %v72, %v164
  %v166 = vpop.f32.mrb[0].mxu0
  %v167 = vpop.f32.mrb[0].mxu0
  %v168 = vadd.f32 %v72, %v167
  %v169 = vpop.f32.mrb[0].mxu0
  %170 = vmatprep.mubr.bf16.mxu0 0
  %171 = vmatmul.mubr.bf16.gmra.mrb[0].mxu0 %v45
  %v172 = vpop.f32.mrb[0].mxu0
  %v173 = vadd.f32 %v72, %v172
  %v174 = vpop.f32.mrb[0].mxu0
  %v175 = vpop.f32.mrb[0].mxu0
  %v176 = vadd.f32 %v72, %v175
  %v177 = vpop.f32.mrb[0].mxu0
  %178 = vmatprep.mubr.bf16.mxu0 0
  %179 = vmatmul.mubr.bf16.gmra.mrb[0].mxu0 %v46
  %v180 = vpop.f32.mrb[0].mxu0
  %v181 = vadd.f32 %v72, %v180
  %v182 = vpop.f32.mrb[0].mxu0
  %v183 = vpop.f32.mrb[0].mxu0
  %v184 = vadd.f32 %v72, %v183
  %v185 = vpop.f32.mrb[0].mxu0
  %186 = vmatprep.mubr.bf16.mxu0 0
  %187 = vmatmul.mubr.bf16.gmra.mrb[0].mxu0 %v47
  %v188 = vpop.f32.mrb[0].mxu0
  %v189 = vadd.f32 %v72, %v188
  %v190 = vpop.f32.mrb[0].mxu0
  %v191 = vpop.f32.mrb[0].mxu0
  %v192 = vadd.f32 %v72, %v191
  %v193 = vpop.f32.mrb[0].mxu0
  %194 = vmatprep.mubr.bf16.mxu0 0
  %195 = vmatmul.mubr.bf16.gmra.mrb[0].mxu0 %v48
  %v196 = vpop.f32.mrb[0].mxu0
  %v197 = vadd.f32 %v72, %v196
  %v198 = vpop.f32.mrb[0].mxu0
  %v199 = vpop.f32.mrb[0].mxu0
  %v200 = vadd.f32 %v72, %v199
  %v201 = vpop.f32.mrb[0].mxu0
  %202 = vmatprep.mubr.bf16.mxu0 0
  %203 = vmatmul.mubr.bf16.gmra.mrb[0].mxu0 %v49
  %v204 = vpop.f32.mrb[0].mxu0
  %v205 = vadd.f32 %v72, %v204
  %v206 = vpop.f32.mrb[0].mxu0
  %v207 = vpop.f32.mrb[0].mxu0
  %v208 = vadd.f32 %v72, %v207
  %v209 = vpop.f32.mrb[0].mxu0
  %210 = vmatprep.mubr.bf16.mxu0 0
  %211 = vmatmul.mubr.bf16.gmra.mrb[0].mxu0 %v50
  %v212 = vpop.f32.mrb[0].mxu0
  %v213 = vadd.f32 %v72, %v212
  %v214 = vpop.f32.mrb[0].mxu0
  %v215 = vpop.f32.mrb[0].mxu0
  %v216 = vadd.f32 %v72, %v215
  %v217 = vpop.f32.mrb[0].mxu0
  %218 = vdwg.mxu0
  %v219 = vmax.f32 %v157, 0.0
  %v220 = vmax.f32 %v160, 0.0
  %v221 = vmax.f32 %v165, 0.0
  %v222 = vmax.f32 %v168, 0.0
  %v223 = vmax.f32 %v173, 0.0
  %v224 = vmax.f32 %v176, 0.0
  %v225 = vmax.f32 %v181, 0.0
  %v226 = vmax.f32 %v184, 0.0
  %v227 = vmax.f32 %v189, 0.0
  %v228 = vmax.f32 %v192, 0.0
  %v229 = vmax.f32 %v197, 0.0
  %v230 = vmax.f32 %v200, 0.0
  %v231 = vmax.f32 %v205, 0.0
  %v232 = vmax.f32 %v208, 0.0
  %v233 = vmax.f32 %v213, 0.0
  %v234 = vmax.f32 %v216, 0.0
  %v235 = vpack.c.bf16 %v220, %v219
  %v236 = vpack.c.bf16 %v222, %v221
  %v237 = vpack.c.bf16 %v224, %v223
  %v238 = vpack.c.bf16 %v226, %v225
  %v239 = vpack.c.bf16 %v228, %v227
  %v240 = vpack.c.bf16 %v230, %v229
  %v241 = vpack.c.bf16 %v232, %v231
  %v242 = vpack.c.bf16 %v234, %v233
  %v243 = vld [vmem:[%s3] sm:$0xf]
  %v244 = vld [vmem:[%s3 + $0x4] sm:$0xf]
  %v245 = vld [vmem:[%s3 + $0x8] sm:$0xf]
  %v246 = vld [vmem:[%s3 + $0xc] sm:$0xf]
  %v247 = vld [vmem:[%s3 + $0x10] sm:$0xf]
  %v248 = vld [vmem:[%s3 + $0x14] sm:$0xf]
  %v249 = vld [vmem:[%s3 + $0x18] sm:$0xf]
  %v250 = vld [vmem:[%s3 + $0x1c] sm:$0xf]
  %v251 = vld [vmem:[%s3 + $0x20] sm:$0xf]
  %v252 = vld [vmem:[%s3 + $0x24] sm:$0xf]
  %v253 = vld [vmem:[%s3 + $0x28] sm:$0xf]
  %v254 = vld [vmem:[%s3 + $0x2c] sm:$0xf]
  %v255 = vld [vmem:[%s3 + $0x30] sm:$0xf]
  %v256 = vld [vmem:[%s3 + $0x34] sm:$0xf]
  %v257 = vld [vmem:[%s3 + $0x38] sm:$0xf]
  %v258 = vld [vmem:[%s4] sm:$0x1]
  %v260 = vlaneseq
  %v261 = vshrl.u32 %v260, 7
  %v262 = vsub.s32 0, %v261
  %v263 = vrot.slane %v258, %v262
  %v280 = vunpack.c.l.b16 %v243
  %v281 = vunpack.c.l.b16 %v244
  %v282 = vunpack.c.l.b16 %v245
  %v283 = vunpack.c.l.b16 %v246
  %v284 = vunpack.c.l.b16 %v247
  %v285 = vunpack.c.l.b16 %v248
  %v286 = vunpack.c.l.b16 %v249
  %v287 = vunpack.c.l.b16 %v250
  %v288 = vunpack.c.l.b16 %v251
  %v289 = vunpack.c.l.b16 %v252
  %v290 = vunpack.c.l.b16 %v253
  %v291 = vunpack.c.l.b16 %v254
  %v292 = vunpack.c.l.b16 %v255
  %v293 = vunpack.c.l.b16 %v256
  %v294 = vunpack.c.l.b16 %v257
  %v295 = vpack.c.b16 %v281, %v280
  %v296 = vpack.c.b16 %v283, %v282
  %v297 = vpack.c.b16 %v285, %v284
  %v298 = vpack.c.b16 %v287, %v286
  %v299 = vpack.c.b16 %v289, %v288
  %v300 = vpack.c.b16 %v291, %v290
  %v301 = vpack.c.b16 %v293, %v292
  %v302 = vpack.c.b16 %v294, %v294
  %vm310 = vcmask 982016
  %v312 = vsel %vm310, %v235, 0
  %v315 = vsel %vm310, %v236, 0
  %v318 = vsel %vm310, %v237, 0
  %v321 = vsel %vm310, %v238, 0
  %v324 = vsel %vm310, %v239, 0
  %v327 = vsel %vm310, %v240, 0
  %v330 = vsel %vm310, %v241, 0
  %v333 = vsel %vm310, %v242, 0
  %vm335 = vcmask 1043456
  %v337 = vsel %vm335, %v302, 0
  %339 = vmatprep.subr.bf16.mxu0 0
  %340 = vmatpush1.bf16.msra.mxu0 %v295
  %341 = vmatprep.subr.bf16.mxu0 0
  %342 = vmatpush1.bf16.msra.mxu0 %v296
  %343 = vmatprep.subr.bf16.mxu0 0
  %344 = vmatpush1.bf16.msra.mxu0 %v297
  %345 = vmatprep.subr.bf16.mxu0 0
  %346 = vmatpush1.bf16.msra.mxu0 %v298
  %347 = vmatprep.subr.bf16.mxu0 0
  %348 = vmatpush1.bf16.msra.mxu0 %v299
  %349 = vmatprep.subr.bf16.mxu0 0
  %350 = vmatpush1.bf16.msra.mxu0 %v300
  %351 = vmatprep.subr.bf16.mxu0 0
  %352 = vmatpush1.bf16.msra.mxu0 %v301
  %353 = vmatprep.subr.bf16.mxu0 0
  %354 = vmatpush1.bf16.msra.mxu0 %v337
  %355 = vmatprep.subr.bf16.mxu0 0
  %356 = vmatpush1.bf16.msra.mxu0 0
  %357 = vmatprep.subr.bf16.mxu0 0
  %358 = vmatpush1.bf16.msra.mxu0 0
  %359 = vmatprep.subr.bf16.mxu0 0
  %360 = vmatpush1.bf16.msra.mxu0 0
  %361 = vmatprep.subr.bf16.mxu0 0
  %362 = vmatpush1.bf16.msra.mxu0 0
  %363 = vmatprep.subr.bf16.mxu0 0
  %364 = vmatpush1.bf16.msra.mxu0 0
  %365 = vmatprep.subr.bf16.mxu0 0
  %366 = vmatpush1.bf16.msra.mxu0 0
  %367 = vmatprep.subr.bf16.mxu0 0
  %368 = vmatpush1.bf16.msra.mxu0 0
  %369 = vmatprep.subr.bf16.mxu0 0
  %370 = vmatpush1.bf16.msra.mxu0 0
  %371 = vmatprep.mubr.bf16.mxu0 0
  %372 = vmatmul.mubr.bf16.gmra.mrb[0].mxu0 %v312
  %v373 = vpop.f32.mrb[0].mxu0
  %v374 = vadd.f32 %v263, %v373
  %v375 = vpop.f32.mrb[0].mxu0
  %v376 = vpop.f32.mrb[0].mxu0
  %v377 = vadd.f32 %v263, %v376
  %v378 = vpop.f32.mrb[0].mxu0
  %379 = vmatprep.mubr.bf16.mxu0 0
  %380 = vmatmul.mubr.bf16.gmra.mrb[0].mxu0 %v315
  %v381 = vpop.f32.mrb[0].mxu0
  %v382 = vadd.f32 %v263, %v381
  %v383 = vpop.f32.mrb[0].mxu0
  %v384 = vpop.f32.mrb[0].mxu0
  %v385 = vadd.f32 %v263, %v384
  %v386 = vpop.f32.mrb[0].mxu0
  %387 = vmatprep.mubr.bf16.mxu0 0
  %388 = vmatmul.mubr.bf16.gmra.mrb[0].mxu0 %v318
  %v389 = vpop.f32.mrb[0].mxu0
  %v390 = vadd.f32 %v263, %v389
  %v391 = vpop.f32.mrb[0].mxu0
  %v392 = vpop.f32.mrb[0].mxu0
  %v393 = vadd.f32 %v263, %v392
  %v394 = vpop.f32.mrb[0].mxu0
  %395 = vmatprep.mubr.bf16.mxu0 0
  %396 = vmatmul.mubr.bf16.gmra.mrb[0].mxu0 %v321
  %v397 = vpop.f32.mrb[0].mxu0
  %v398 = vadd.f32 %v263, %v397
  %v399 = vpop.f32.mrb[0].mxu0
  %v400 = vpop.f32.mrb[0].mxu0
  %v401 = vadd.f32 %v263, %v400
  %v402 = vpop.f32.mrb[0].mxu0
  %403 = vmatprep.mubr.bf16.mxu0 0
  %404 = vmatmul.mubr.bf16.gmra.mrb[0].mxu0 %v324
  %v405 = vpop.f32.mrb[0].mxu0
  %v406 = vadd.f32 %v263, %v405
  %v407 = vpop.f32.mrb[0].mxu0
  %v408 = vpop.f32.mrb[0].mxu0
  %v409 = vadd.f32 %v263, %v408
  %v410 = vpop.f32.mrb[0].mxu0
  %411 = vmatprep.mubr.bf16.mxu0 0
  %412 = vmatmul.mubr.bf16.gmra.mrb[0].mxu0 %v327
  %v413 = vpop.f32.mrb[0].mxu0
  %v414 = vadd.f32 %v263, %v413
  %v415 = vpop.f32.mrb[0].mxu0
  %v416 = vpop.f32.mrb[0].mxu0
  %v417 = vadd.f32 %v263, %v416
  %v418 = vpop.f32.mrb[0].mxu0
  %419 = vmatprep.mubr.bf16.mxu0 0
  %420 = vmatmul.mubr.bf16.gmra.mrb[0].mxu0 %v330
  %v421 = vpop.f32.mrb[0].mxu0
  %v422 = vadd.f32 %v263, %v421
  %v423 = vpop.f32.mrb[0].mxu0
  %v424 = vpop.f32.mrb[0].mxu0
  %v425 = vadd.f32 %v263, %v424
  %v426 = vpop.f32.mrb[0].mxu0
  %427 = vmatprep.mubr.bf16.mxu0 0
  %428 = vmatmul.mubr.bf16.gmra.mrb[0].mxu0 %v333
  %v429 = vpop.f32.mrb[0].mxu0
  %v430 = vadd.f32 %v263, %v429
  %v431 = vpop.f32.mrb[0].mxu0
  %v432 = vpop.f32.mrb[0].mxu0
  %v433 = vadd.f32 %v263, %v432
  %v434 = vpop.f32.mrb[0].mxu0
  %435 = vdwg.mxu0
  %v436 = vmax.f32 %v374, 0.0
  %v437 = vmax.f32 %v377, 0.0
  %v438 = vmax.f32 %v382, 0.0
  %v439 = vmax.f32 %v385, 0.0
  %v440 = vmax.f32 %v390, 0.0
  %v441 = vmax.f32 %v393, 0.0
  %v442 = vmax.f32 %v398, 0.0
  %v443 = vmax.f32 %v401, 0.0
  %v444 = vmax.f32 %v406, 0.0
  %v445 = vmax.f32 %v409, 0.0
  %v446 = vmax.f32 %v414, 0.0
  %v447 = vmax.f32 %v417, 0.0
  %v448 = vmax.f32 %v422, 0.0
  %v449 = vmax.f32 %v425, 0.0
  %v450 = vmax.f32 %v430, 0.0
  %v451 = vmax.f32 %v433, 0.0
  %v452 = vpack.c.bf16 %v437, %v436
  %v453 = vpack.c.bf16 %v439, %v438
  %v454 = vpack.c.bf16 %v441, %v440
  %v455 = vpack.c.bf16 %v443, %v442
  %v456 = vpack.c.bf16 %v445, %v444
  %v457 = vpack.c.bf16 %v447, %v446
  %v458 = vpack.c.bf16 %v449, %v448
  %v459 = vpack.c.bf16 %v451, %v450
  %v460 = vld [vmem:[%s5] sm:$0xf]
  %v461 = vld [vmem:[%s5 + $0x4] sm:$0xf]
  %v462 = vld [vmem:[%s5 + $0x8] sm:$0xf]
  %v463 = vld [vmem:[%s5 + $0xc] sm:$0xf]
  %v464 = vld [vmem:[%s5 + $0x10] sm:$0xf]
  %v465 = vld [vmem:[%s5 + $0x14] sm:$0xf]
  %v466 = vld [vmem:[%s5 + $0x18] sm:$0xf]
  %v467 = vld [vmem:[%s5 + $0x1c] sm:$0xf]
  %v468 = vld [vmem:[%s5 + $0x20] sm:$0xf]
  %v469 = vld [vmem:[%s5 + $0x24] sm:$0xf]
  %v470 = vld [vmem:[%s6] sm:$0x1]
  %v472 = vlaneseq
  %v473 = vshrl.u32 %v472, 7
  %v474 = vsub.s32 0, %v473
  %v475 = vrot.slane %v470, %v474
  %v487 = vunpack.c.l.b16 %v460
  %v488 = vunpack.c.l.b16 %v461
  %v489 = vunpack.c.l.b16 %v462
  %v490 = vunpack.c.l.b16 %v463
  %v491 = vunpack.c.l.b16 %v464
  %v492 = vunpack.c.l.b16 %v465
  %v493 = vunpack.c.l.b16 %v466
  %v494 = vunpack.c.l.b16 %v467
  %v495 = vunpack.c.l.b16 %v468
  %v496 = vunpack.c.l.b16 %v469
  %v497 = vpack.c.b16 %v488, %v487
  %v498 = vpack.c.b16 %v490, %v489
  %v499 = vpack.c.b16 %v492, %v491
  %v500 = vpack.c.b16 %v494, %v493
  %v501 = vpack.c.b16 %v496, %v495
  %vm507 = vcmask 654336
  %v509 = vsel %vm507, %v452, 0
  %v512 = vsel %vm507, %v453, 0
  %v515 = vsel %vm507, %v454, 0
  %v518 = vsel %vm507, %v455, 0
  %v521 = vsel %vm507, %v456, 0
  %v524 = vsel %vm507, %v457, 0
  %v527 = vsel %vm507, %v458, 0
  %v530 = vsel %vm507, %v459, 0
  %532 = vmatprep.subr.bf16.mxu0 0
  %533 = vmatpush1.bf16.msra.mxu0 %v497
  %534 = vmatprep.subr.bf16.mxu0 0
  %535 = vmatpush1.bf16.msra.mxu0 %v498
  %536 = vmatprep.subr.bf16.mxu0 0
  %537 = vmatpush1.bf16.msra.mxu0 %v499
  %538 = vmatprep.subr.bf16.mxu0 0
  %539 = vmatpush1.bf16.msra.mxu0 %v500
  %540 = vmatprep.subr.bf16.mxu0 0
  %541 = vmatpush1.bf16.msra.mxu0 %v501
  %542 = vmatprep.subr.bf16.mxu0 0
  %543 = vmatpush1.bf16.msra.mxu0 0
  %544 = vmatprep.subr.bf16.mxu0 0
  %545 = vmatpush1.bf16.msra.mxu0 0
  %546 = vmatprep.subr.bf16.mxu0 0
  %547 = vmatpush1.bf16.msra.mxu0 0
  %548 = vmatprep.subr.bf16.mxu0 0
  %549 = vmatpush1.bf16.msra.mxu0 0
  %550 = vmatprep.subr.bf16.mxu0 0
  %551 = vmatpush1.bf16.msra.mxu0 0
  %552 = vmatprep.subr.bf16.mxu0 0
  %553 = vmatpush1.bf16.msra.mxu0 0
  %554 = vmatprep.subr.bf16.mxu0 0
  %555 = vmatpush1.bf16.msra.mxu0 0
  %556 = vmatprep.subr.bf16.mxu0 0
  %557 = vmatpush1.bf16.msra.mxu0 0
  %558 = vmatprep.subr.bf16.mxu0 0
  %559 = vmatpush1.bf16.msra.mxu0 0
  %560 = vmatprep.subr.bf16.mxu0 0
  %561 = vmatpush1.bf16.msra.mxu0 0
  %562 = vmatprep.subr.bf16.mxu0 0
  %563 = vmatpush1.bf16.msra.mxu0 0
  %564 = vmatprep.mubr.bf16.mxu0 0
  %565 = vmatmul.mubr.bf16.gmra.mrb[0].mxu0 %v509
  %v566 = vpop.f32.mrb[0].mxu0
  %v567 = vadd.f32 %v475, %v566
  %v568 = vpop.f32.mrb[0].mxu0
  %v569 = vpop.f32.mrb[0].mxu0
  %v570 = vadd.f32 %v475, %v569
  %v571 = vpop.f32.mrb[0].mxu0
  %572 = vmatprep.mubr.bf16.mxu0 0
  %573 = vmatmul.mubr.bf16.gmra.mrb[0].mxu0 %v512
  %v574 = vpop.f32.mrb[0].mxu0
  %v575 = vadd.f32 %v475, %v574
  %v576 = vpop.f32.mrb[0].mxu0
  %v577 = vpop.f32.mrb[0].mxu0
  %v578 = vadd.f32 %v475, %v577
  %v579 = vpop.f32.mrb[0].mxu0
  %580 = vmatprep.mubr.bf16.mxu0 0
  %581 = vmatmul.mubr.bf16.gmra.mrb[0].mxu0 %v515
  %v582 = vpop.f32.mrb[0].mxu0
  %v583 = vadd.f32 %v475, %v582
  %v584 = vpop.f32.mrb[0].mxu0
  %v585 = vpop.f32.mrb[0].mxu0
  %v586 = vadd.f32 %v475, %v585
  %v587 = vpop.f32.mrb[0].mxu0
  %588 = vmatprep.mubr.bf16.mxu0 0
  %589 = vmatmul.mubr.bf16.gmra.mrb[0].mxu0 %v518
  %v590 = vpop.f32.mrb[0].mxu0
  %v591 = vadd.f32 %v475, %v590
  %v592 = vpop.f32.mrb[0].mxu0
  %v593 = vpop.f32.mrb[0].mxu0
  %v594 = vadd.f32 %v475, %v593
  %v595 = vpop.f32.mrb[0].mxu0
  %596 = vmatprep.mubr.bf16.mxu0 0
  %597 = vmatmul.mubr.bf16.gmra.mrb[0].mxu0 %v521
  %v598 = vpop.f32.mrb[0].mxu0
  %v599 = vadd.f32 %v475, %v598
  %v600 = vpop.f32.mrb[0].mxu0
  %v601 = vpop.f32.mrb[0].mxu0
  %v602 = vadd.f32 %v475, %v601
  %v603 = vpop.f32.mrb[0].mxu0
  %604 = vmatprep.mubr.bf16.mxu0 0
  %605 = vmatmul.mubr.bf16.gmra.mrb[0].mxu0 %v524
  %v606 = vpop.f32.mrb[0].mxu0
  %v607 = vadd.f32 %v475, %v606
  %v608 = vpop.f32.mrb[0].mxu0
  %v609 = vpop.f32.mrb[0].mxu0
  %v610 = vadd.f32 %v475, %v609
  %v611 = vpop.f32.mrb[0].mxu0
  %612 = vmatprep.mubr.bf16.mxu0 0
  %613 = vmatmul.mubr.bf16.gmra.mrb[0].mxu0 %v527
  %v614 = vpop.f32.mrb[0].mxu0
  %v615 = vadd.f32 %v475, %v614
  %v616 = vpop.f32.mrb[0].mxu0
  %v617 = vpop.f32.mrb[0].mxu0
  %v618 = vadd.f32 %v475, %v617
  %v619 = vpop.f32.mrb[0].mxu0
  %620 = vmatprep.mubr.bf16.mxu0 0
  %621 = vmatmul.mubr.bf16.gmra.mrb[0].mxu0 %v530
  %v622 = vpop.f32.mrb[0].mxu0
  %v623 = vadd.f32 %v475, %v622
  %v624 = vpop.f32.mrb[0].mxu0
  %v625 = vpop.f32.mrb[0].mxu0
  %v626 = vadd.f32 %v475, %v625
  %v627 = vpop.f32.mrb[0].mxu0
  %628 = vdwg.mxu0
  %vm629 = vcmask 130048
  %630 = vst.msk [vmem:[%s7] sm:$0xff] %vm629, %v567
  %631 = vst.msk [vmem:[%s7 + $0x8] sm:$0xff] %vm629, %v570
  %632 = vst.msk [vmem:[%s7 + $0x10] sm:$0xff] %vm629, %v575
  %633 = vst.msk [vmem:[%s7 + $0x18] sm:$0xff] %vm629, %v578
  %634 = vst.msk [vmem:[%s7 + $0x20] sm:$0xff] %vm629, %v583
  %635 = vst.msk [vmem:[%s7 + $0x28] sm:$0xff] %vm629, %v586
  %636 = vst.msk [vmem:[%s7 + $0x30] sm:$0xff] %vm629, %v591
  %637 = vst.msk [vmem:[%s7 + $0x38] sm:$0xff] %vm629, %v594
  %638 = vst.msk [vmem:[%s7 + $0x40] sm:$0xff] %vm629, %v599
  %639 = vst.msk [vmem:[%s7 + $0x48] sm:$0xff] %vm629, %v602
  %640 = vst.msk [vmem:[%s7 + $0x50] sm:$0xff] %vm629, %v607
  %641 = vst.msk [vmem:[%s7 + $0x58] sm:$0xff] %vm629, %v610
  %642 = vst.msk [vmem:[%s7 + $0x60] sm:$0xff] %vm629, %v615
  %643 = vst.msk [vmem:[%s7 + $0x68] sm:$0xff] %vm629, %v618
  %644 = vst.msk [vmem:[%s7 + $0x70] sm:$0xff] %vm629, %v623
  %645 = vst.msk [vmem:[%s7 + $0x78] sm:$0xff] %vm629, %v626
  // Predicated region
  $region30: #{tpu_custom_call.1} parent=0 // pred_check
    _
  $region31: #{tpu_custom_call.1} parent=0 // pred_check_branch
    %647 = sbr.rel (0) target = $region33
  $region32: #{tpu_custom_call.1} parent=0 // pred_region
    _
  $region33: #{tpu_custom_call.1} parent=0 // pred_fallthru
    _
  // Predicated region
  $region34: #{tpu_custom_call.1} parent=0 // pred_check
    _
  $region35: #{tpu_custom_call.1} parent=0 // pred_check_branch
    %649 = sbr.rel (0) target = $region37
  $region36: #{tpu_custom_call.1} parent=0 // pred_region
    _
  $region37: #{tpu_custom_call.1} parent=0 // pred_fallthru
    _

</llo_original>
